<compile_context>
chip_gen: v7x
topology: tpu7x:2x2x1
jax: 0.10.0
libtpu: 0.0.40
codegen_flags: <defaults>
</compile_context>

<pallas_src>
import jax
import jax.numpy as jnp
from jax.experimental import pallas as pl
from jax.experimental.pallas import tpu as pltpu


def _round_up(n, m):
    return ((n + m - 1) // m) * m


def _attention3d_kernel(x_ref, wbd_ref, e_ref, s_ref, o_ref):
    # x_ref:   (tb, T*D)  lane-dense input rows            (VMEM)
    # wbd_ref: (T*D, T)   block-diagonal tiling of w       (VMEM, constant)
    # e_ref:   (T, T*D)   one-hot expansion matrix, f32    (VMEM, constant)
    # s_ref:   (T*D, D)   stacked-identity group-sum       (VMEM, constant)
    # o_ref:   (tb, D)
    x2 = x_ref[...]                                          # (tb, T*D), native dtype

    # scores[b, t] = sum_d x[b, t, d] * w[d]   -- MXU, K = T*D
    scores = jnp.dot(x2, wbd_ref[...],
                     preferred_element_type=jnp.float32)     # (tb, T) f32

    # Numerically stable softmax over the sequence axis (dim=1 in PyTorch).
    # (Linear bias dropped: softmax is shift-invariant.)
    m = jnp.max(scores, axis=-1, keepdims=True)              # (tb, 1)
    e = jnp.exp(scores - m)
    denom = jnp.sum(e, axis=-1, keepdims=True)
    p = e * pl.reciprocal(denom, approx=True)                # (tb, T) f32

    # Expand p to lane-dense width: p_exp[b, t*D + d] = p[b, t]   -- MXU
    p_exp = jnp.dot(p, e_ref[...],
                    preferred_element_type=jnp.float32)      # (tb, T*D) f32

    # Weighted values (VPU, lane-dense, input dtype), then group-sum over T
    # via the stacked-identity matmul  -- MXU, K = T*D.
    y = x2 * p_exp.astype(x2.dtype)                          # (tb, T*D)
    out = jnp.dot(y, s_ref[...],
                  preferred_element_type=jnp.float32)        # (tb, D) f32
    o_ref[...] = out.astype(o_ref.dtype)


def attention3d(x, w, b=None, *, block_b=None):
    """x: (B, T, D), w: (D,), b: scalar (no-op under softmax) -> (B, D)."""
    del b  # softmax shift-invariance: the Linear bias cannot change the output
    B, T, D = x.shape
    TD = T * D
    itemsize = jnp.dtype(x.dtype).itemsize

    # True in-VMEM row footprint (last dim padded to a lane multiple).
    lane_row = _round_up(TD, 128)
    row_vmem_bytes = lane_row * itemsize

    if block_b is None:
        # ~4 MiB x blocks: big enough to reach >=85% of HBM roofline per the
        # tile-sweep data, small enough (double-buffered + f32 temporaries)
        # to fit every generation's scoped VMEM, including v7x.
        budget_bytes = 4 * 1024 * 1024
        block_b = max(8, budget_bytes // max(1, row_vmem_bytes))

    B8 = _round_up(B, 8)
    tb = max(8, (min(int(block_b), B8) // 8) * 8)            # sublane-aligned
    # v7x megacore: keep >= 2 grid steps whenever the batch allows, so both
    # TensorCores get work (harmless on 1-TC v5e/v6e).
    if B8 >= 16:
        tb = min(tb, max(8, (B8 // 2) // 8 * 8))

    Bp = _round_up(B, tb)
    x2 = x.reshape(B, TD)                                    # free row-major view
    if Bp != B:
        # Zero rows -> zero scores -> uniform softmax over zero rows ->
        # exactly-zero outputs; sliced off below.
        x2 = jnp.pad(x2, ((0, Bp - B), (0, 0)))

    cdt = x.dtype
    eye_t = jnp.eye(T, dtype=cdt)
    # W_bd[t*D + d, t'] = w[d] * delta(t, t')
    wbd = (eye_t[:, None, :] * w.astype(cdt)[None, :, None]).reshape(TD, T)
    # E[t, t'*D + d] = delta(t, t')   (kept f32: multiplies the f32 softmax)
    e_exp = jnp.repeat(jnp.eye(T, dtype=jnp.float32), D, axis=1)   # (T, T*D)
    # S[t*D + d, d'] = delta(d, d')
    s_sum = jnp.tile(jnp.eye(D, dtype=cdt), (T, 1))                # (T*D, D)

    # Explicit VMEM limit from the real (lane-padded) footprint:
    #   2x double-buffered x block + f32 temporaries + output + constants.
    block_bytes = tb * row_vmem_bytes
    vmem_limit = (2 * block_bytes
                  + 3 * tb * lane_row * 4
                  + 2 * tb * _round_up(D, 128) * 4
                  + (1 << 20))
    vmem_limit = int(min(max(vmem_limit, 16 << 20), 32 << 20))

    out = pl.pallas_call(
        _attention3d_kernel,
        out_shape=jax.ShapeDtypeStruct((Bp, D), x.dtype),
        grid_spec=pltpu.PrefetchScalarGridSpec(
            num_scalar_prefetch=0,
            grid=(Bp // tb,),
            in_specs=[
                pl.BlockSpec((tb, TD), lambda i: (i, 0)),
                pl.BlockSpec((TD, T), lambda i: (0, 0)),
                pl.BlockSpec((T, TD), lambda i: (0, 0)),
                pl.BlockSpec((TD, D), lambda i: (0, 0)),
            ],
            out_specs=pl.BlockSpec((tb, D), lambda i: (i, 0)),
        ),
        compiler_params=pltpu.CompilerParams(
            dimension_semantics=("parallel",),
            vmem_limit_bytes=vmem_limit),
    )(x2, wbd, e_exp, s_sum)
    return out[:B]


def attention3d_ref(x, w, b):
    scores = jnp.einsum("btd,d->bt", x, w) + b
    p = jax.nn.softmax(scores, axis=1)
    return jnp.sum(x * p[..., None], axis=1)


if __name__ == "__main__":
    key = jax.random.PRNGKey(0)
    B, T, D = 2, 8, 32  # batch, seq, input_dim

    kx, kw, kb = jax.random.split(key, 3)
    x = jax.random.normal(kx, (B, T, D), dtype=jnp.float32)
    # Deterministic "Linear(input_dim, 1)" parameters (synthetic init).
    w = jax.random.normal(kw, (D,), dtype=jnp.float32) * 0.1
    b = jax.random.normal(kb, (), dtype=jnp.float32) * 0.1

    out = jax.block_until_ready(attention3d(x, w, b))
    ref = attention3d_ref(x, w, b)

    assert out.shape == (B, D)
    # approx=True reciprocal (EUP) loosens the softmax denominator by a few
    # ULPs -> compare with a slightly relaxed tolerance.
    assert jnp.allclose(out, ref, atol=2e-3, rtol=2e-3), "mismatch vs reference"

    print("KERNEL_OK")
</pallas_src>

<mosaic_0001>
module attributes {stable_mosaic.version = 11 : i64} {
  func.func @_attention3d_kernel(%arg0: i32, %arg1: memref<8x256xf32, #tpu.memory_space<vmem>>, %arg2: memref<256x8xf32, #tpu.memory_space<vmem>>, %arg3: memref<8x256xf32, #tpu.memory_space<vmem>>, %arg4: memref<256x32xf32, #tpu.memory_space<vmem>>, %arg5: memref<8x32xf32, #tpu.memory_space<vmem>>) attributes {dimension_semantics = [#tpu.dimension_semantics<parallel>], iteration_bounds = array<i64: 1>, scalar_prefetch = 0 : i64, scratch_operands = 0 : i64, tpu.core_type = #tpu.core_type<tc>, window_params = [{transform_indices = @transform_0, window_bounds = array<i64: 8, 256>}, {pipeline_mode = #tpu.pipeline_mode<synchronous>, transform_indices = @transform_1, window_bounds = array<i64: 256, 8>}, {pipeline_mode = #tpu.pipeline_mode<synchronous>, transform_indices = @transform_2, window_bounds = array<i64: 8, 256>}, {pipeline_mode = #tpu.pipeline_mode<synchronous>, transform_indices = @transform_3, window_bounds = array<i64: 256, 32>}, {transform_indices = @transform_4, window_bounds = array<i64: 8, 32>}]} {
    %c0 = arith.constant 0 : index
    %c0_0 = arith.constant 0 : index
    %0 = vector.load %arg1[%c0, %c0_0] : memref<8x256xf32, #tpu.memory_space<vmem>>, vector<8x256xf32>
    %c0_1 = arith.constant 0 : index
    %c0_2 = arith.constant 0 : index
    %1 = vector.load %arg2[%c0_1, %c0_2] : memref<256x8xf32, #tpu.memory_space<vmem>>, vector<256x8xf32>
    %cst = arith.constant dense<0.000000e+00> : vector<8x8xf32>
    %2 = tpu.matmul %0, %1, %cst {dimension_numbers = #tpu.dot_dimension_numbers<[1], [0], [0], [1], [0, 0, 1, 1], [], []>} : vector<8x256xf32>, vector<256x8xf32>, vector<8x8xf32> -> vector<8x8xf32>
    %cst_3 = arith.constant dense<0xFF800000> : vector<8xf32>
    %3 = vector.multi_reduction <maximumf>, %2, %cst_3 [1] : vector<8x8xf32> to vector<8xf32>
    %4 = vector.shape_cast %3 : vector<8xf32> to vector<8x1xf32>
    %5 = vector.broadcast %4 : vector<8x1xf32> to vector<8x8xf32>
    %6 = arith.subf %2, %5 : vector<8x8xf32>
    %7 = math.exp %6 : vector<8x8xf32>
    %cst_4 = arith.constant dense<0.000000e+00> : vector<8xf32>
    %8 = vector.multi_reduction <add>, %7, %cst_4 [1] : vector<8x8xf32> to vector<8xf32>
    %9 = vector.shape_cast %8 : vector<8xf32> to vector<8x1xf32>
    %10 = tpu.reciprocal %9 {approx = true} : vector<8x1xf32> -> vector<8x1xf32>
    %11 = vector.broadcast %10 : vector<8x1xf32> to vector<8x8xf32>
    %12 = arith.mulf %7, %11 : vector<8x8xf32>
    %c0_5 = arith.constant 0 : index
    %c0_6 = arith.constant 0 : index
    %13 = vector.load %arg3[%c0_5, %c0_6] : memref<8x256xf32, #tpu.memory_space<vmem>>, vector<8x256xf32>
    %cst_7 = arith.constant dense<0.000000e+00> : vector<8x256xf32>
    %14 = tpu.matmul %12, %13, %cst_7 {dimension_numbers = #tpu.dot_dimension_numbers<[1], [0], [0], [1], [0, 0, 1, 1], [], []>} : vector<8x8xf32>, vector<8x256xf32>, vector<8x256xf32> -> vector<8x256xf32>
    %15 = arith.mulf %0, %14 : vector<8x256xf32>
    %c0_8 = arith.constant 0 : index
    %c0_9 = arith.constant 0 : index
    %16 = vector.load %arg4[%c0_8, %c0_9] : memref<256x32xf32, #tpu.memory_space<vmem>>, vector<256x32xf32>
    %cst_10 = arith.constant dense<0.000000e+00> : vector<8x32xf32>
    %17 = tpu.matmul %15, %16, %cst_10 {dimension_numbers = #tpu.dot_dimension_numbers<[1], [0], [0], [1], [0, 0, 1, 1], [], []>} : vector<8x256xf32>, vector<256x32xf32>, vector<8x32xf32> -> vector<8x32xf32>
    %c0_11 = arith.constant 0 : index
    %c0_12 = arith.constant 0 : index
    %18 = vector.load %arg5[%c0_11, %c0_12] : memref<8x32xf32, #tpu.memory_space<vmem>>, vector<8x32xf32>
    tpu.vector_store %arg5[%c0_11, %c0_12], %17 {strides = array<i32>} : memref<8x32xf32, #tpu.memory_space<vmem>>, vector<8x32xf32>,
    return
  }
  func.func @transform_0(%arg0: i32) -> (i32, i32) {
    %c0_i32 = arith.constant 0 : i32
    %c0_i32_0 = arith.constant 0 : i32
    return %arg0, %c0_i32 : i32, i32
  }
  func.func @transform_1(%arg0: i32) -> (i32, i32) {
    %c0_i32 = arith.constant 0 : i32
    %c0_i32_0 = arith.constant 0 : i32
    %c0_i32_1 = arith.constant 0 : i32
    return %c0_i32, %c0_i32_0 : i32, i32
  }
  func.func @transform_2(%arg0: i32) -> (i32, i32) {
    %c0_i32 = arith.constant 0 : i32
    %c0_i32_0 = arith.constant 0 : i32
    %c0_i32_1 = arith.constant 0 : i32
    return %c0_i32, %c0_i32_0 : i32, i32
  }
  func.func @transform_3(%arg0: i32) -> (i32, i32) {
    %c0_i32 = arith.constant 0 : i32
    %c0_i32_0 = arith.constant 0 : i32
    %c0_i32_1 = arith.constant 0 : i32
    return %c0_i32, %c0_i32_0 : i32, i32
  }
  func.func @transform_4(%arg0: i32) -> (i32, i32) {
    %c0_i32 = arith.constant 0 : i32
    %c0_i32_0 = arith.constant 0 : i32
    return %arg0, %c0_i32 : i32, i32
  }
}

</mosaic_0001>

<llo_original>
// kernel: tpu_custom_call.1
$region0: #{tpu_custom_call.1}
  #allocation0 [shape = 'u32[]', space=smem, size = 0x4, offset = 0x4, fixed_abs, tag = 'smem constant byte address 0x4 - core index']
  #allocation1 [shape = 'u32[144,128]{1,0:T(1,128)}', space=vmem, size = 0x12000, scoped, tag = 'internal scratch']
  %s0 = inlined_call_operand.vmem [shape: f32[8,256], index: 0, kind: input, shape index: {}]
  %s1 = inlined_call_operand.vmem [shape: f32[256,8], index: 1, kind: input, shape index: {}]
  %s2 = inlined_call_operand.vmem [shape: f32[8,256], index: 2, kind: input, shape index: {}]
  %s3 = inlined_call_operand.vmem [shape: f32[256,32], index: 3, kind: input, shape index: {}]
  %s4 = inlined_call_operand.hbm [shape: f32[8,32], index: 4, kind: output, shape index: {}]
  %s5 = sld [smem:[#allocation0]]
  $region26: #{tpu_custom_call.1} parent=0
    _
  %s7 = ssub.s32 1, %s5
  %s8 = scalar_select 0, %s7, %s5
  $region1: #{tpu_custom_call.1} parent=0
    #allocation2 [shape = 'u8[4096]{0}', space=vmem, size = 0x1000, scoped, tag = 'output window, operand 0, single buffered']
    #allocation3 [shape = 's32[1]{0}', space=sflag, size = 0x4, scoped, tag = 'scoped memory for tpu_custom_call.1']
    %9 = vsyncpa [#allocation3], 0
    // Predicated region
    $region2: #{tpu_custom_call.1} parent=1 // pred_check
      _
    $region3: #{tpu_custom_call.1} parent=1 // pred_check_branch
      %11 = sbr.rel (0) target = $region5
    $region4: #{tpu_custom_call.1} parent=1 // pred_region
      _
    $region5: #{tpu_custom_call.1} parent=1 // pred_fallthru
      _
    // Predicated region
    $region6: #{tpu_custom_call.1} parent=1 // pred_check
      _
    $region7: #{tpu_custom_call.1} parent=1 // pred_check_branch
      %13 = sbr.rel (0) target = $region9
    $region8: #{tpu_custom_call.1} parent=1 // pred_region
      _
    $region9: #{tpu_custom_call.1} parent=1 // pred_fallthru
      _
    // Predicated region
    $region10: #{tpu_custom_call.1} parent=1 // pred_check
      _
    $region11: #{tpu_custom_call.1} parent=1 // pred_check_branch
      %15 = sbr.rel (0) target = $region13
    $region12: #{tpu_custom_call.1} parent=1 // pred_region
      _
    $region13: #{tpu_custom_call.1} parent=1 // pred_fallthru
      _
    // Predicated region
    $region14: #{tpu_custom_call.1} parent=1 // pred_check
      _
    $region15: #{tpu_custom_call.1} parent=1 // pred_check_branch
      %17 = sbr.rel (0) target = $region17
    $region16: #{tpu_custom_call.1} parent=1 // pred_region
      _
    $region17: #{tpu_custom_call.1} parent=1 // pred_fallthru
      _
    %v18 = vld [vmem:[%s0] sm:$0xff]
    %v19 = vld [vmem:[%s0 + $0x8] sm:$0xff]
    %v20 = vld [vmem:[%s1] sm:$0xff]
    %v21 = vld [vmem:[%s1 + $0x8] sm:$0xff]
    %v22 = vld [vmem:[%s1 + $0x10] sm:$0xff]
    %v23 = vld [vmem:[%s1 + $0x18] sm:$0xff]
    %v24 = vld [vmem:[%s1 + $0x20] sm:$0xff]
    %v25 = vld [vmem:[%s1 + $0x28] sm:$0xff]
    %v26 = vld [vmem:[%s1 + $0x30] sm:$0xff]
    %v27 = vld [vmem:[%s1 + $0x38] sm:$0xff]
    %v28 = vld [vmem:[%s1 + $0x40] sm:$0xff]
    %v29 = vld [vmem:[%s1 + $0x48] sm:$0xff]
    %v30 = vld [vmem:[%s1 + $0x50] sm:$0xff]
    %v31 = vld [vmem:[%s1 + $0x58] sm:$0xff]
    %v32 = vld [vmem:[%s1 + $0x60] sm:$0xff]
    %v33 = vld [vmem:[%s1 + $0x68] sm:$0xff]
    %v34 = vld [vmem:[%s1 + $0x70] sm:$0xff]
    %v35 = vld [vmem:[%s1 + $0x78] sm:$0xff]
    %v36 = vld [vmem:[%s1 + $0x80] sm:$0xff]
    %v37 = vld [vmem:[%s1 + $0x88] sm:$0xff]
    %v38 = vld [vmem:[%s1 + $0x90] sm:$0xff]
    %v39 = vld [vmem:[%s1 + $0x98] sm:$0xff]
    %v40 = vld [vmem:[%s1 + $0xa0] sm:$0xff]
    %v41 = vld [vmem:[%s1 + $0xa8] sm:$0xff]
    %v42 = vld [vmem:[%s1 + $0xb0] sm:$0xff]
    %v43 = vld [vmem:[%s1 + $0xb8] sm:$0xff]
    %v44 = vld [vmem:[%s1 + $0xc0] sm:$0xff]
    %v45 = vld [vmem:[%s1 + $0xc8] sm:$0xff]
    %v46 = vld [vmem:[%s1 + $0xd0] sm:$0xff]
    %v47 = vld [vmem:[%s1 + $0xd8] sm:$0xff]
    %v48 = vld [vmem:[%s1 + $0xe0] sm:$0xff]
    %v49 = vld [vmem:[%s1 + $0xe8] sm:$0xff]
    %v50 = vld [vmem:[%s1 + $0xf0] sm:$0xff]
    %v51 = vld [vmem:[%s1 + $0xf8] sm:$0xff]
    %52 = vmatprep.subr.mxu0 0.0
    %53 = vmatpush1.msra.mxu0 %v20
    %54 = vmatprep.subr.mxu0 0.0
    %55 = vmatpush1.msra.mxu0 %v21
    %56 = vmatprep.subr.mxu0 0.0
    %57 = vmatpush1.msra.mxu0 %v22
    %58 = vmatprep.subr.mxu0 0.0
    %59 = vmatpush1.msra.mxu0 %v23
    %60 = vmatprep.subr.mxu0 0.0
    %61 = vmatpush1.msra.mxu0 %v24
    %62 = vmatprep.subr.mxu0 0.0
    %63 = vmatpush1.msra.mxu0 %v25
    %64 = vmatprep.subr.mxu0 0.0
    %65 = vmatpush1.msra.mxu0 %v26
    %66 = vmatprep.subr.mxu0 0.0
    %67 = vmatpush1.msra.mxu0 %v27
    %68 = vmatprep.subr.mxu0 0.0
    %69 = vmatpush1.msra.mxu0 %v28
    %70 = vmatprep.subr.mxu0 0.0
    %71 = vmatpush1.msra.mxu0 %v29
    %72 = vmatprep.subr.mxu0 0.0
    %73 = vmatpush1.msra.mxu0 %v30
    %74 = vmatprep.subr.mxu0 0.0
    %75 = vmatpush1.msra.mxu0 %v31
    %76 = vmatprep.subr.mxu0 0.0
    %77 = vmatpush1.msra.mxu0 %v32
    %78 = vmatprep.subr.mxu0 0.0
    %79 = vmatpush1.msra.mxu0 %v33
    %80 = vmatprep.subr.mxu0 0.0
    %81 = vmatpush1.msra.mxu0 %v34
    %82 = vmatprep.subr.mxu0 0.0
    %83 = vmatpush1.msra.mxu0 %v35
    %84 = vmatprep.subr.mxu0 0.0
    %85 = vmatpush1.msra.mxu0 %v36
    %86 = vmatprep.subr.mxu0 0.0
    %87 = vmatpush1.msra.mxu0 %v37
    %88 = vmatprep.subr.mxu0 0.0
    %89 = vmatpush1.msra.mxu0 %v38
    %90 = vmatprep.subr.mxu0 0.0
    %91 = vmatpush1.msra.mxu0 %v39
    %92 = vmatprep.subr.mxu0 0.0
    %93 = vmatpush1.msra.mxu0 %v40
    %94 = vmatprep.subr.mxu0 0.0
    %95 = vmatpush1.msra.mxu0 %v41
    %96 = vmatprep.subr.mxu0 0.0
    %97 = vmatpush1.msra.mxu0 %v42
    %98 = vmatprep.subr.mxu0 0.0
    %99 = vmatpush1.msra.mxu0 %v43
    %100 = vmatprep.subr.mxu0 0.0
    %101 = vmatpush1.msra.mxu0 %v44
    %102 = vmatprep.subr.mxu0 0.0
    %103 = vmatpush1.msra.mxu0 %v45
    %104 = vmatprep.subr.mxu0 0.0
    %105 = vmatpush1.msra.mxu0 %v46
    %106 = vmatprep.subr.mxu0 0.0
    %107 = vmatpush1.msra.mxu0 %v47
    %108 = vmatprep.subr.mxu0 0.0
    %109 = vmatpush1.msra.mxu0 %v48
    %110 = vmatprep.subr.mxu0 0.0
    %111 = vmatpush1.msra.mxu0 %v49
    %112 = vmatprep.subr.mxu0 0.0
    %113 = vmatpush1.msra.mxu0 %v50
    %114 = vmatprep.subr.mxu0 0.0
    %115 = vmatpush1.msra.mxu0 %v51
    %116 = vmatprep.mubr.f32.mxu0 %v19
    %117 = vmatmul.mubr.f32.gmra.mrb[0].mxu0 %v18
    %v118 = vpop.f32.mrb[0].mxu0
    %v119 = vadd.f32 0.0, %v118
    %v120 = vpop.f32.mrb[0].mxu0
    %121 = vdwg.mxu0
    %vm122 = vcmask 64512
    %v123 = vsel %vm122, %v119, -inf
    %124 = vmax.xlane.f32.xlu0 %v123
    %v125 = vpop.xlane.xlu0 %124
    %v126 = vsub.f32 %v119, %v125
    %v127 = vmul.f32 %v126, 1.442695
    %v128 = vpow.pop %v127
    %v129 = vsel %vm122, %v128, 0.0
    %130 = vadd.xlane.f32.xlu0 %v129
    %v131 = vpop.xlane.xlu0 %130
    %v132 = vrcp.pop %v131
    %v133 = vmul.f32 %v128, %v132
    %v134 = vld [vmem:[%s2] sm:$0xff]
    %v135 = vld [vmem:[%s2 + $0x8] sm:$0xff]
    %v137 = vsel %vm122, %v133, 0
    %139 = vmatprep.subr.mxu0 %v135
    %140 = vmatpush1.msra.mxu0 %v134
    %141 = vmatprep.subr.mxu0 0.0
    %142 = vmatpush1.msra.mxu0 0.0
    %143 = vmatprep.subr.mxu0 0.0
    %144 = vmatpush1.msra.mxu0 0.0
    %145 = vmatprep.subr.mxu0 0.0
    %146 = vmatpush1.msra.mxu0 0.0
    %147 = vmatprep.subr.mxu0 0.0
    %148 = vmatpush1.msra.mxu0 0.0
    %149 = vmatprep.subr.mxu0 0.0
    %150 = vmatpush1.msra.mxu0 0.0
    %151 = vmatprep.subr.mxu0 0.0
    %152 = vmatpush1.msra.mxu0 0.0
    %153 = vmatprep.subr.mxu0 0.0
    %154 = vmatpush1.msra.mxu0 0.0
    %155 = vmatprep.subr.mxu0 0.0
    %156 = vmatpush1.msra.mxu0 0.0
    %157 = vmatprep.subr.mxu0 0.0
    %158 = vmatpush1.msra.mxu0 0.0
    %159 = vmatprep.subr.mxu0 0.0
    %160 = vmatpush1.msra.mxu0 0.0
    %161 = vmatprep.subr.mxu0 0.0
    %162 = vmatpush1.msra.mxu0 0.0
    %163 = vmatprep.subr.mxu0 0.0
    %164 = vmatpush1.msra.mxu0 0.0
    %165 = vmatprep.subr.mxu0 0.0
    %166 = vmatpush1.msra.mxu0 0.0
    %167 = vmatprep.subr.mxu0 0.0
    %168 = vmatpush1.msra.mxu0 0.0
    %169 = vmatprep.subr.mxu0 0.0
    %170 = vmatpush1.msra.mxu0 0.0
    %171 = vmatprep.subr.mxu0 0.0
    %172 = vmatpush1.msra.mxu0 0.0
    %173 = vmatprep.subr.mxu0 0.0
    %174 = vmatpush1.msra.mxu0 0.0
    %175 = vmatprep.subr.mxu0 0.0
    %176 = vmatpush1.msra.mxu0 0.0
    %177 = vmatprep.subr.mxu0 0.0
    %178 = vmatpush1.msra.mxu0 0.0
    %179 = vmatprep.subr.mxu0 0.0
    %180 = vmatpush1.msra.mxu0 0.0
    %181 = vmatprep.subr.mxu0 0.0
    %182 = vmatpush1.msra.mxu0 0.0
    %183 = vmatprep.subr.mxu0 0.0
    %184 = vmatpush1.msra.mxu0 0.0
    %185 = vmatprep.subr.mxu0 0.0
    %186 = vmatpush1.msra.mxu0 0.0
    %187 = vmatprep.subr.mxu0 0.0
    %188 = vmatpush1.msra.mxu0 0.0
    %189 = vmatprep.subr.mxu0 0.0
    %190 = vmatpush1.msra.mxu0 0.0
    %191 = vmatprep.subr.mxu0 0.0
    %192 = vmatpush1.msra.mxu0 0.0
    %193 = vmatprep.subr.mxu0 0.0
    %194 = vmatpush1.msra.mxu0 0.0
    %195 = vmatprep.subr.mxu0 0.0
    %196 = vmatpush1.msra.mxu0 0.0
    %197 = vmatprep.subr.mxu0 0.0
    %198 = vmatpush1.msra.mxu0 0.0
    %199 = vmatprep.subr.mxu0 0.0
    %200 = vmatpush1.msra.mxu0 0.0
    %201 = vmatprep.subr.mxu0 0.0
    %202 = vmatpush1.msra.mxu0 0.0
    %203 = vmatprep.mubr.f32.mxu0 0.0
    %204 = vmatmul.mubr.f32.gmra.mrb[0].mxu0 %v137
    %v205 = vpop.f32.mrb[0].mxu0
    %v206 = vadd.f32 0.0, %v205
    %v207 = vpop.f32.mrb[0].mxu0
    %v208 = vadd.f32 0.0, %v207
    %209 = vdwg.mxu0
    %v210 = vmul.f32 %v18, %v206
    %v211 = vmul.f32 %v19, %v208
    %v212 = vld [vmem:[%s3] sm:$0xff]
    %v213 = vld [vmem:[%s3 + $0x8] sm:$0xff]
    %v214 = vld [vmem:[%s3 + $0x10] sm:$0xff]
    %v215 = vld [vmem:[%s3 + $0x18] sm:$0xff]
    %v216 = vld [vmem:[%s3 + $0x20] sm:$0xff]
    %v217 = vld [vmem:[%s3 + $0x28] sm:$0xff]
    %v218 = vld [vmem:[%s3 + $0x30] sm:$0xff]
    %v219 = vld [vmem:[%s3 + $0x38] sm:$0xff]
    %v220 = vld [vmem:[%s3 + $0x40] sm:$0xff]
    %v221 = vld [vmem:[%s3 + $0x48] sm:$0xff]
    %v222 = vld [vmem:[%s3 + $0x50] sm:$0xff]
    %v223 = vld [vmem:[%s3 + $0x58] sm:$0xff]
    %v224 = vld [vmem:[%s3 + $0x60] sm:$0xff]
    %v225 = vld [vmem:[%s3 + $0x68] sm:$0xff]
    %v226 = vld [vmem:[%s3 + $0x70] sm:$0xff]
    %v227 = vld [vmem:[%s3 + $0x78] sm:$0xff]
    %v228 = vld [vmem:[%s3 + $0x80] sm:$0xff]
    %v229 = vld [vmem:[%s3 + $0x88] sm:$0xff]
    %v230 = vld [vmem:[%s3 + $0x90] sm:$0xff]
    %v231 = vld [vmem:[%s3 + $0x98] sm:$0xff]
    %v232 = vld [vmem:[%s3 + $0xa0] sm:$0xff]
    %v233 = vld [vmem:[%s3 + $0xa8] sm:$0xff]
    %v234 = vld [vmem:[%s3 + $0xb0] sm:$0xff]
    %v235 = vld [vmem:[%s3 + $0xb8] sm:$0xff]
    %v236 = vld [vmem:[%s3 + $0xc0] sm:$0xff]
    %v237 = vld [vmem:[%s3 + $0xc8] sm:$0xff]
    %v238 = vld [vmem:[%s3 + $0xd0] sm:$0xff]
    %v239 = vld [vmem:[%s3 + $0xd8] sm:$0xff]
    %v240 = vld [vmem:[%s3 + $0xe0] sm:$0xff]
    %v241 = vld [vmem:[%s3 + $0xe8] sm:$0xff]
    %v242 = vld [vmem:[%s3 + $0xf0] sm:$0xff]
    %v243 = vld [vmem:[%s3 + $0xf8] sm:$0xff]
    %244 = vmatprep.subr.mxu0 0.0
    %245 = vmatpush1.msra.mxu0 %v212
    %246 = vmatprep.subr.mxu0 0.0
    %247 = vmatpush1.msra.mxu0 %v213
    %248 = vmatprep.subr.mxu0 0.0
    %249 = vmatpush1.msra.mxu0 %v214
    %250 = vmatprep.subr.mxu0 0.0
    %251 = vmatpush1.msra.mxu0 %v215
    %252 = vmatprep.subr.mxu0 0.0
    %253 = vmatpush1.msra.mxu0 %v216
    %254 = vmatprep.subr.mxu0 0.0
    %255 = vmatpush1.msra.mxu0 %v217
    %256 = vmatprep.subr.mxu0 0.0
    %257 = vmatpush1.msra.mxu0 %v218
    %258 = vmatprep.subr.mxu0 0.0
    %259 = vmatpush1.msra.mxu0 %v219
    %260 = vmatprep.subr.mxu0 0.0
    %261 = vmatpush1.msra.mxu0 %v220
    %262 = vmatprep.subr.mxu0 0.0
    %263 = vmatpush1.msra.mxu0 %v221
    %264 = vmatprep.subr.mxu0 0.0
    %265 = vmatpush1.msra.mxu0 %v222
    %266 = vmatprep.subr.mxu0 0.0
    %267 = vmatpush1.msra.mxu0 %v223
    %268 = vmatprep.subr.mxu0 0.0
    %269 = vmatpush1.msra.mxu0 %v224
    %270 = vmatprep.subr.mxu0 0.0
    %271 = vmatpush1.msra.mxu0 %v225
    %272 = vmatprep.subr.mxu0 0.0
    %273 = vmatpush1.msra.mxu0 %v226
    %274 = vmatprep.subr.mxu0 0.0
    %275 = vmatpush1.msra.mxu0 %v227
    %276 = vmatprep.subr.mxu0 0.0
    %277 = vmatpush1.msra.mxu0 %v228
    %278 = vmatprep.subr.mxu0 0.0
    %279 = vmatpush1.msra.mxu0 %v229
    %280 = vmatprep.subr.mxu0 0.0
    %281 = vmatpush1.msra.mxu0 %v230
    %282 = vmatprep.subr.mxu0 0.0
    %283 = vmatpush1.msra.mxu0 %v231
    %284 = vmatprep.subr.mxu0 0.0
    %285 = vmatpush1.msra.mxu0 %v232
    %286 = vmatprep.subr.mxu0 0.0
    %287 = vmatpush1.msra.mxu0 %v233
    %288 = vmatprep.subr.mxu0 0.0
    %289 = vmatpush1.msra.mxu0 %v234
    %290 = vmatprep.subr.mxu0 0.0
    %291 = vmatpush1.msra.mxu0 %v235
    %292 = vmatprep.subr.mxu0 0.0
    %293 = vmatpush1.msra.mxu0 %v236
    %294 = vmatprep.subr.mxu0 0.0
    %295 = vmatpush1.msra.mxu0 %v237
    %296 = vmatprep.subr.mxu0 0.0
    %297 = vmatpush1.msra.mxu0 %v238
    %298 = vmatprep.subr.mxu0 0.0
    %299 = vmatpush1.msra.mxu0 %v239
    %300 = vmatprep.subr.mxu0 0.0
    %301 = vmatpush1.msra.mxu0 %v240
    %302 = vmatprep.subr.mxu0 0.0
    %303 = vmatpush1.msra.mxu0 %v241
    %304 = vmatprep.subr.mxu0 0.0
    %305 = vmatpush1.msra.mxu0 %v242
    %306 = vmatprep.subr.mxu0 0.0
    %307 = vmatpush1.msra.mxu0 %v243
    %308 = vmatprep.mubr.f32.mxu0 %v211
    %309 = vmatmul.mubr.f32.gmra.mrb[0].mxu0 %v210
    %v310 = vpop.f32.mrb[0].mxu0
    %v311 = vadd.f32 0.0, %v310
    %v312 = vpop.f32.mrb[0].mxu0
    %313 = vdwg.mxu0
    %vm314 = vcmask 261120
    %315 = vst.msk [vmem:[#allocation2] sm:$0xff] %vm314, %v311
    // Predicated region
    $region18: #{tpu_custom_call.1} parent=1 // pred_check
      _
    $region19: #{tpu_custom_call.1} parent=1 // pred_check_branch
      %317 = sbr.rel (0) target = $region21
    $region20: #{tpu_custom_call.1} parent=1 // pred_region
      %s319 = ssub.s32 128, 128
      %320 = vsyncadd [#allocation3], %s319
      %s322 = sshll.u32 [#allocation2], 4
      %s323 = int_to_ptr.vmem [resolvable:$true] %s322
      %325 = dma.vmem_to_hbm [thread:$0]  %s323, 128, %s4, [#allocation3]
    $region21: #{tpu_custom_call.1} parent=1 // pred_fallthru
      _
    // Predicated region
    $region22: #{tpu_custom_call.1} parent=1 // pred_check
      _
    $region23: #{tpu_custom_call.1} parent=1 // pred_check_branch
      %327 = sbr.rel (0) target = $region25
    $region24: #{tpu_custom_call.1} parent=1 // pred_region
      %328 = dma.done [#allocation3], 128
    $region25: #{tpu_custom_call.1} parent=1 // pred_fallthru
      _
    %329 = vsyncpa [#allocation3], 1

</llo_original>
